<compile_context>
chip_gen: v6e
topology: v6e:2x2x1
jax: 0.10.0
libtpu: 0.0.40
codegen_flags: <defaults>
</compile_context>

<pallas_src>
import jax
import jax.numpy as jnp
from jax.experimental import pallas as pl
from jax.experimental.pallas import tpu as pltpu

MIN_VALUE = 1.165433630886078
MAX_VALUE = 9.495014390253015

# Problem geometry (small shapes consistent with the module).
C_IN = 3                    # Conv3d in-channels (= leading dim of x1)
D, H = 4, 4                 # spatial dims carried by x1
K_IN = 12                   # Linear in-features
W_FEAT = 8                  # Linear out-features == conv "W" spatial extent
C_OUT = 8                   # Conv3d out-channels
DP, HP, WP = D + 2, H + 2, W_FEAT + 2   # padded output volume (6, 6, 10)
ROWS_W = D * H * K_IN       # 192  (contraction dim of the folded Linear)
N_OUT = DP * HP * WP        # 360  (lane-dense flattened output per channel)


# ---------- Fused kernel: Linear + bias + ReLU + Conv1x1x1 + bias + clamp ----------
def fused_kernel(x_ref, lin_ref, conv_ref, o_ref):
    # x_ref   : (3, 192)   f32 VMEM   x1 flattened per channel (d,h,k row-major)
    # lin_ref : (193, 360) f32 VMEM   rows 0..191 = padding-folded Linear weight,
    #                                 row 192 = padding-folded Linear bias
    # conv_ref: (8, 4)     f32 VMEM   cols 0..2 = 1x1x1 conv weight, col 3 = conv bias
    # o_ref   : (8, 360)   f32 VMEM   clamp(Conv3d(relu(Linear(x)))), flattened (d',h',w')

    w = lin_ref[:ROWS_W, :]                       # (192, 360)
    b = lin_ref[ROWS_W:, :]                       # (1, 360)

    # Linear + bias + ReLU in one MXU matmul: the result IS the zero-padded
    # conv input (channel, flattened padded volume) -- border columns of `w`
    # and `b` are structurally zero, so no border handling is needed below.
    v2 = jnp.maximum(
        jnp.dot(x_ref[...], w, preferred_element_type=jnp.float32) + b, 0.0)   # (3, 360)

    # 1x1x1 conv = channel mix; all 8 output channels computed with 3 broadcast
    # FMAs in the lane-packed (C_OUT, 360) layout (VPU; MXU would be idle here).
    cp = conv_ref[...]                            # (8, 4)
    acc = (cp[:, 3:4]
           + cp[:, 0:1] * v2[0:1, :]
           + cp[:, 1:2] * v2[1:2, :]
           + cp[:, 2:3] * v2[2:3, :])             # (8, 360)

    # Single dense, lane-friendly store of the whole result.
    o_ref[...] = jnp.clip(acc, MIN_VALUE, MAX_VALUE)


def _fused_call(x_flat, lin_pack, conv_pack):
    return pl.pallas_call(
        fused_kernel,
        out_shape=jax.ShapeDtypeStruct((C_OUT, N_OUT), jnp.float32),
        in_specs=[
            pl.BlockSpec(memory_space=pltpu.MemorySpace.VMEM),   # x_flat
            pl.BlockSpec(memory_space=pltpu.MemorySpace.VMEM),   # lin_pack
            pl.BlockSpec(memory_space=pltpu.MemorySpace.VMEM),   # conv_pack
        ],
        out_specs=pl.BlockSpec(memory_space=pltpu.MemorySpace.VMEM),
    )(x_flat, lin_pack, conv_pack)


# ---------------- Parameter prep (hoisted, done once) ----------------
def prepare_params(lin_w, lin_b, conv_w, conv_b):
    # lin_w: (8, 12) PyTorch Linear weight; lin_b: (8,)
    # conv_w: (8, 3) (== PyTorch (8,3,1,1,1) squeezed); conv_b: (8,)
    #
    # Fold ALL conv zero-padding (D, H and W borders) into the Linear weight:
    #   lin_pack[(d*4+h)*12 + k, ((d+1)*6 + (h+1))*10 + (w+1)] = lin_w[w, k]
    #   lin_pack[192,            ((d+1)*6 + (h+1))*10 + (w+1)] = lin_b[w]
    # so  relu(x_flat @ W + b)  is already the fully zero-padded conv input,
    # flattened per channel in the exact (d', h', w') output order.
    lin_w = lin_w.astype(jnp.float32)
    lin_b = lin_b.astype(jnp.float32)
    conv_w = conv_w.astype(jnp.float32)
    conv_b = conv_b.astype(jnp.float32)

    eye_d = jnp.eye(DP, dtype=jnp.float32)[1:1 + D]          # (4, 6)  d -> d+1
    eye_h = jnp.eye(HP, dtype=jnp.float32)[1:1 + H]          # (4, 6)  h -> h+1
    eye_w = jnp.eye(WP, dtype=jnp.float32)[1:1 + W_FEAT]     # (8, 10) w -> w+1

    lw_pad = lin_w.T @ eye_w                                  # (12, 10), cols 0,9 == 0
    w_big = jnp.einsum('da,hb,kc->dhkabc', eye_d, eye_h, lw_pad)
    w_big = w_big.reshape(ROWS_W, N_OUT)                      # (192, 360)

    b_pad = lin_b @ eye_w                                     # (10,),  entries 0,9 == 0
    ind_d = eye_d.sum(axis=0)                                 # (6,) interior-d indicator
    ind_h = eye_h.sum(axis=0)                                 # (6,) interior-h indicator
    b_big = jnp.einsum('a,b,c->abc', ind_d, ind_h, b_pad).reshape(1, N_OUT)

    lin_pack = jnp.concatenate([w_big, b_big], axis=0)        # (193, 360)
    conv_pack = jnp.concatenate([conv_w, conv_b[:, None]], axis=1)   # (8, 4)
    return lin_pack, conv_pack


@jax.jit
def model_forward(x1, lin_pack, conv_pack):
    # x1: (3, 4, 4, 12) f32  ->  v4: (8, 6, 6, 10) f32
    x_flat = x1.reshape(C_IN, ROWS_W)             # contiguous, zero-cost reshape
    out_flat = _fused_call(x_flat, lin_pack, conv_pack)       # (8, 360)
    return out_flat.reshape(C_OUT, DP, HP, WP)    # contiguous, zero-cost reshape


# ---------------- Plain-JAX reference (for a sanity check) ----------------
def reference_forward(x1, lin_w, lin_b, conv_w, conv_b):
    v1 = jnp.einsum('cdhk,nk->cdhn', x1, lin_w,
                    precision=jax.lax.Precision.HIGHEST) + lin_b
    v2 = jnp.maximum(v1, 0.0)
    v2p = jnp.pad(v2, ((0, 0), (1, 1), (1, 1), (1, 1)))
    v3 = jnp.einsum('oc,cdhw->odhw', conv_w, v2p,
                    precision=jax.lax.Precision.HIGHEST)
    v3 = v3 + conv_b[:, None, None, None]
    return jnp.clip(v3, MIN_VALUE, MAX_VALUE)


if __name__ == "__main__":
    key = jax.random.PRNGKey(0)
    k1, k2, k3, k4, k5 = jax.random.split(key, 5)

    # small shapes consistent with the module: x1 = (3, 4, 4, 12)
    x1 = jax.random.normal(k1, (C_IN, D, H, K_IN), dtype=jnp.float32)

    # deterministic parameter init (PyTorch-style uniform bounds)
    lin_bound = 1.0 / jnp.sqrt(12.0)
    lin_w = jax.random.uniform(k2, (W_FEAT, K_IN), jnp.float32, -lin_bound, lin_bound)
    lin_b = jax.random.uniform(k3, (W_FEAT,), jnp.float32, -lin_bound, lin_bound)
    conv_bound = 1.0 / jnp.sqrt(3.0)       # fan_in = 3 * 1 * 1 * 1
    conv_w = jax.random.uniform(k4, (C_OUT, C_IN), jnp.float32, -conv_bound, conv_bound)
    conv_b = jax.random.uniform(k5, (C_OUT,), jnp.float32, -conv_bound, conv_bound)

    # one-time param prep (outside the per-forward path)
    lin_pack, conv_pack = prepare_params(lin_w, lin_b, conv_w, conv_b)

    out = model_forward(x1, lin_pack, conv_pack)
    out = jax.block_until_ready(out)
    assert out.shape == (C_OUT, DP, HP, WP), out.shape

    # sanity check vs. plain JAX (loose tol to be robust to MXU f32 pass count)
    ref = reference_forward(x1, lin_w, lin_b, conv_w, conv_b)
    max_err = float(jnp.max(jnp.abs(out - ref)))
    assert max_err < 5e-2, f"max abs err {max_err}"

    print("KERNEL_OK")
</pallas_src>

<mosaic_0001>
module attributes {stable_mosaic.version = 11 : i64} {
  func.func @fused_kernel(%arg0: memref<3x192xf32, #tpu.memory_space<vmem>>, %arg1: memref<193x360xf32, #tpu.memory_space<vmem>>, %arg2: memref<8x4xf32, #tpu.memory_space<vmem>>, %arg3: memref<8x360xf32, #tpu.memory_space<vmem>>) attributes {dimension_semantics = [], scalar_prefetch = 0 : i64, scratch_operands = 0 : i64, tpu.core_type = #tpu.core_type<tc>} {
    %c0 = arith.constant 0 : index
    %c0_0 = arith.constant 0 : index
    %0 = vector.load %arg1[%c0, %c0_0] : memref<193x360xf32, #tpu.memory_space<vmem>>, vector<192x360xf32>
    %c192 = arith.constant 192 : index
    %c0_1 = arith.constant 0 : index
    %1 = vector.load %arg1[%c192, %c0_1] : memref<193x360xf32, #tpu.memory_space<vmem>>, vector<1x360xf32>
    %c0_2 = arith.constant 0 : index
    %c0_3 = arith.constant 0 : index
    %2 = vector.load %arg0[%c0_2, %c0_3] : memref<3x192xf32, #tpu.memory_space<vmem>>, vector<3x192xf32>
    %cst = arith.constant dense<0.000000e+00> : vector<3x360xf32>
    %3 = tpu.matmul %2, %0, %cst {dimension_numbers = #tpu.dot_dimension_numbers<[1], [0], [0], [1], [0, 0, 1, 1], [], []>} : vector<3x192xf32>, vector<192x360xf32>, vector<3x360xf32> -> vector<3x360xf32>
    %4 = vector.broadcast %1 : vector<1x360xf32> to vector<3x360xf32>
    %5 = arith.addf %3, %4 : vector<3x360xf32>
    %cst_4 = arith.constant 0.000000e+00 : f32
    %6 = vector.broadcast %cst_4 : f32 to vector<3x360xf32>
    %7 = arith.maximumf %5, %6 : vector<3x360xf32>
    %c0_5 = arith.constant 0 : index
    %c0_6 = arith.constant 0 : index
    %8 = vector.load %arg2[%c0_5, %c0_6] : memref<8x4xf32, #tpu.memory_space<vmem>>, vector<8x4xf32>
    %9 = vector.extract_strided_slice %8 {offsets = [0, 3], sizes = [8, 1], strides = [1, 1]} : vector<8x4xf32> to vector<8x1xf32>
    %10 = vector.extract_strided_slice %8 {offsets = [0, 0], sizes = [8, 1], strides = [1, 1]} : vector<8x4xf32> to vector<8x1xf32>
    %11 = vector.extract_strided_slice %7 {offsets = [0, 0], sizes = [1, 360], strides = [1, 1]} : vector<3x360xf32> to vector<1x360xf32>
    %12 = vector.broadcast %10 : vector<8x1xf32> to vector<8x360xf32>
    %13 = vector.broadcast %11 : vector<1x360xf32> to vector<8x360xf32>
    %14 = arith.mulf %12, %13 : vector<8x360xf32>
    %15 = vector.broadcast %9 : vector<8x1xf32> to vector<8x360xf32>
    %16 = arith.addf %15, %14 : vector<8x360xf32>
    %17 = vector.extract_strided_slice %8 {offsets = [0, 1], sizes = [8, 1], strides = [1, 1]} : vector<8x4xf32> to vector<8x1xf32>
    %18 = vector.extract_strided_slice %7 {offsets = [1, 0], sizes = [1, 360], strides = [1, 1]} : vector<3x360xf32> to vector<1x360xf32>
    %19 = vector.broadcast %17 : vector<8x1xf32> to vector<8x360xf32>
    %20 = vector.broadcast %18 : vector<1x360xf32> to vector<8x360xf32>
    %21 = arith.mulf %19, %20 : vector<8x360xf32>
    %22 = arith.addf %16, %21 : vector<8x360xf32>
    %23 = vector.extract_strided_slice %8 {offsets = [0, 2], sizes = [8, 1], strides = [1, 1]} : vector<8x4xf32> to vector<8x1xf32>
    %24 = vector.extract_strided_slice %7 {offsets = [2, 0], sizes = [1, 360], strides = [1, 1]} : vector<3x360xf32> to vector<1x360xf32>
    %25 = vector.broadcast %23 : vector<8x1xf32> to vector<8x360xf32>
    %26 = vector.broadcast %24 : vector<1x360xf32> to vector<8x360xf32>
    %27 = arith.mulf %25, %26 : vector<8x360xf32>
    %28 = arith.addf %22, %27 : vector<8x360xf32>
    %cst_7 = arith.constant 1.16543365 : f32
    %cst_8 = arith.constant 9.49501419 : f32
    %29 = vector.broadcast %cst_7 : f32 to vector<8x360xf32>
    %30 = arith.maximumf %29, %28 : vector<8x360xf32>
    %31 = vector.broadcast %cst_8 : f32 to vector<8x360xf32>
    %32 = arith.minimumf %31, %30 : vector<8x360xf32>
    %c0_9 = arith.constant 0 : index
    %c0_10 = arith.constant 0 : index
    %33 = vector.load %arg3[%c0_9, %c0_10] : memref<8x360xf32, #tpu.memory_space<vmem>>, vector<8x360xf32>
    tpu.vector_store %arg3[%c0_9, %c0_10], %32 {strides = array<i32>} : memref<8x360xf32, #tpu.memory_space<vmem>>, vector<8x360xf32>,
    return
  }
}

</mosaic_0001>

<llo_original>
// kernel: model_forward.1
$region0: #{model_forward.1}
  #allocation0 [shape = 'u32[]', space=smem, size = 0x4, offset = 0x4, fixed_abs, tag = 'smem constant byte address 0x4 - core index']
  #allocation1 [shape = 'u32[144,128]{1,0:T(1,128)}', space=vmem, size = 0x12000, scoped, tag = 'internal scratch']
  %s0 = inlined_call_operand.vmem [shape: f32[3,192], index: 0, kind: input, shape index: {}]
  %s1 = inlined_call_operand.hbm [shape: f32[193,360], index: 1, kind: input, shape index: {}]
  %s2 = inlined_call_operand.vmem [shape: f32[8,4], index: 2, kind: input, shape index: {}]
  %s3 = inlined_call_operand.vmem [shape: f32[8,360], index: 3, kind: output, shape index: {}]
  %s4 = sld [smem:[#allocation0]]
  $region26: #{model_forward.1} parent=0
    _
  %s6 = ssub.s32 1, %s4
  %s7 = scalar_select 0, %s6, %s4
  $region1: #{model_forward.1} parent=0
    #allocation2 [shape = 'u8[307200]{0}', space=vmem, size = 0x4b000, scoped, tag = 'input window, operand 1, single buffered']
    #allocation3 [shape = 's32[1]{0}', space=sflag, size = 0x4, scoped, tag = 'scoped memory for model_forward.1']
    %8 = vsyncpa [#allocation3], 0
    // Predicated region
    $region2: #{model_forward.1} parent=1 // pred_check
      _
    $region3: #{model_forward.1} parent=1 // pred_check_branch
      %10 = sbr.rel (0) target = $region5
    $region4: #{model_forward.1} parent=1 // pred_region
      _
    $region5: #{model_forward.1} parent=1 // pred_fallthru
      _
    // Predicated region
    $region6: #{model_forward.1} parent=1 // pred_check
      _
    $region7: #{model_forward.1} parent=1 // pred_check_branch
      %12 = sbr.rel (0) target = $region9
    $region8: #{model_forward.1} parent=1 // pred_region
      %s14 = ssub.s32 9600, 9600
      %15 = vsyncadd [#allocation3], %s14
      %s16 = sshll.u32 [#allocation2], 4
      %s17 = int_to_ptr.vmem [resolvable:$true] %s16
      %22 = dma.hbm_to_vmem [thread:$0]  %s1, 9600, %s17, [#allocation3], 384, 384, 24
    $region9: #{model_forward.1} parent=1 // pred_fallthru
      _
    // Predicated region
    $region10: #{model_forward.1} parent=1 // pred_check
      _
    $region11: #{model_forward.1} parent=1 // pred_check_branch
      %24 = sbr.rel (0) target = $region13
    $region12: #{model_forward.1} parent=1 // pred_region
      _
    $region13: #{model_forward.1} parent=1 // pred_fallthru
      _
    // Predicated region
    $region14: #{model_forward.1} parent=1 // pred_check
      _
    $region15: #{model_forward.1} parent=1 // pred_check_branch
      %26 = sbr.rel (0) target = $region17
    $region16: #{model_forward.1} parent=1 // pred_region
      %27 = dma.done [#allocation3], 9600
    $region17: #{model_forward.1} parent=1 // pred_fallthru
      _
    %v28 = vld [vmem:[#allocation2] sm:$0xff]
    %v29 = vld [vmem:[#allocation2 + $0x8] sm:$0xff]
    %v30 = vld [vmem:[#allocation2 + $0x10] sm:$0xff]
    %v31 = vld [vmem:[#allocation2 + $0x18] sm:$0xff]
    %v32 = vld [vmem:[#allocation2 + $0x20] sm:$0xff]
    %v33 = vld [vmem:[#allocation2 + $0x28] sm:$0xff]
    %v34 = vld [vmem:[#allocation2 + $0x30] sm:$0xff]
    %v35 = vld [vmem:[#allocation2 + $0x38] sm:$0xff]
    %v36 = vld [vmem:[#allocation2 + $0x40] sm:$0xff]
    %v37 = vld [vmem:[#allocation2 + $0x48] sm:$0xff]
    %v38 = vld [vmem:[#allocation2 + $0x50] sm:$0xff]
    %v39 = vld [vmem:[#allocation2 + $0x58] sm:$0xff]
    %v40 = vld [vmem:[#allocation2 + $0x60] sm:$0xff]
    %v41 = vld [vmem:[#allocation2 + $0x68] sm:$0xff]
    %v42 = vld [vmem:[#allocation2 + $0x70] sm:$0xff]
    %v43 = vld [vmem:[#allocation2 + $0x78] sm:$0xff]
    %v44 = vld [vmem:[#allocation2 + $0x80] sm:$0xff]
    %v45 = vld [vmem:[#allocation2 + $0x88] sm:$0xff]
    %v46 = vld [vmem:[#allocation2 + $0x90] sm:$0xff]
    %v47 = vld [vmem:[#allocation2 + $0x98] sm:$0xff]
    %v48 = vld [vmem:[#allocation2 + $0xa0] sm:$0xff]
    %v49 = vld [vmem:[#allocation2 + $0xa8] sm:$0xff]
    %v50 = vld [vmem:[#allocation2 + $0xb0] sm:$0xff]
    %v51 = vld [vmem:[#allocation2 + $0xb8] sm:$0xff]
    %v52 = vld [vmem:[#allocation2 + $0xc0] sm:$0xff]
    %v53 = vld [vmem:[#allocation2 + $0xc8] sm:$0xff]
    %v54 = vld [vmem:[#allocation2 + $0xd0] sm:$0xff]
    %v55 = vld [vmem:[#allocation2 + $0xd8] sm:$0xff]
    %v56 = vld [vmem:[#allocation2 + $0xe0] sm:$0xff]
    %v57 = vld [vmem:[#allocation2 + $0xe8] sm:$0xff]
    %v58 = vld [vmem:[#allocation2 + $0xf0] sm:$0xff]
    %v59 = vld [vmem:[#allocation2 + $0xf8] sm:$0xff]
    %v60 = vld [vmem:[#allocation2 + $0x100] sm:$0xff]
    %v61 = vld [vmem:[#allocation2 + $0x108] sm:$0xff]
    %v62 = vld [vmem:[#allocation2 + $0x110] sm:$0xff]
    %v63 = vld [vmem:[#allocation2 + $0x118] sm:$0xff]
    %v64 = vld [vmem:[#allocation2 + $0x120] sm:$0xff]
    %v65 = vld [vmem:[#allocation2 + $0x128] sm:$0xff]
    %v66 = vld [vmem:[#allocation2 + $0x130] sm:$0xff]
    %v67 = vld [vmem:[#allocation2 + $0x138] sm:$0xff]
    %v68 = vld [vmem:[#allocation2 + $0x140] sm:$0xff]
    %v69 = vld [vmem:[#allocation2 + $0x148] sm:$0xff]
    %v70 = vld [vmem:[#allocation2 + $0x150] sm:$0xff]
    %v71 = vld [vmem:[#allocation2 + $0x158] sm:$0xff]
    %v72 = vld [vmem:[#allocation2 + $0x160] sm:$0xff]
    %v73 = vld [vmem:[#allocation2 + $0x168] sm:$0xff]
    %v74 = vld [vmem:[#allocation2 + $0x170] sm:$0xff]
    %v75 = vld [vmem:[#allocation2 + $0x178] sm:$0xff]
    %v76 = vld [vmem:[#allocation2 + $0x180] sm:$0xff]
    %v77 = vld [vmem:[#allocation2 + $0x188] sm:$0xff]
    %v78 = vld [vmem:[#allocation2 + $0x190] sm:$0xff]
    %v79 = vld [vmem:[#allocation2 + $0x198] sm:$0xff]
    %v80 = vld [vmem:[#allocation2 + $0x1a0] sm:$0xff]
    %v81 = vld [vmem:[#allocation2 + $0x1a8] sm:$0xff]
    %v82 = vld [vmem:[#allocation2 + $0x1b0] sm:$0xff]
    %v83 = vld [vmem:[#allocation2 + $0x1b8] sm:$0xff]
    %v84 = vld [vmem:[#allocation2 + $0x1c0] sm:$0xff]
    %v85 = vld [vmem:[#allocation2 + $0x1c8] sm:$0xff]
    %v86 = vld [vmem:[#allocation2 + $0x1d0] sm:$0xff]
    %v87 = vld [vmem:[#allocation2 + $0x1d8] sm:$0xff]
    %v88 = vld [vmem:[#allocation2 + $0x1e0] sm:$0xff]
    %v89 = vld [vmem:[#allocation2 + $0x1e8] sm:$0xff]
    %v90 = vld [vmem:[#allocation2 + $0x1f0] sm:$0xff]
    %v91 = vld [vmem:[#allocation2 + $0x1f8] sm:$0xff]
    %v92 = vld [vmem:[#allocation2 + $0x200] sm:$0xff]
    %v93 = vld [vmem:[#allocation2 + $0x208] sm:$0xff]
    %v94 = vld [vmem:[#allocation2 + $0x210] sm:$0xff]
    %v95 = vld [vmem:[#allocation2 + $0x218] sm:$0xff]
    %v96 = vld [vmem:[#allocation2 + $0x220] sm:$0xff]
    %v97 = vld [vmem:[#allocation2 + $0x228] sm:$0xff]
    %v98 = vld [vmem:[#allocation2 + $0x230] sm:$0xff]
    %v99 = vld [vmem:[#allocation2 + $0x238] sm:$0xff]
    %s100 = scalar_lea.vmem [#allocation2], 576
    %v101 = vld [vmem:[%s100] ss:$8 sm:$0x7]
    %v102 = vld [vmem:[%s0] sm:$0x77]
    %v104 = vlaneseq
    %v105 = vshrl.u32 %v104, 7
    %v106 = vsub.s32 0, %v105
    %v107 = vrot.slane %v101, %v106
    %v108 = vlaneseq
    %v109 = vshrl.u32 %v108, 7
    %v110 = vsub.s32 1, %v109
    %v111 = vrot.slane %v101, %v110
    %v112 = vlaneseq
    %v113 = vshrl.u32 %v112, 7
    %v114 = vsub.s32 2, %v113
    %v115 = vrot.slane %v101, %v114
    %v120 = vcombine.high %v102, %v102
    %vm121 = vcmask 523264
    %v122 = vsel %vm121, %v120, 0
    %124 = vmatprep.subr.mxu0 %v74
    %125 = vmatpush1.msra.mxu0 %v73
    %126 = vmatprep.subr.mxu0 %v71
    %127 = vmatpush1.msra.mxu0 %v70
    %128 = vmatprep.subr.mxu0 %v68
    %129 = vmatpush1.msra.mxu0 %v67
    %130 = vmatprep.subr.mxu0 %v65
    %131 = vmatpush1.msra.mxu0 %v64
    %132 = vmatprep.subr.mxu0 %v62
    %133 = vmatpush1.msra.mxu0 %v61
    %134 = vmatprep.subr.mxu0 %v59
    %135 = vmatpush1.msra.mxu0 %v58
    %136 = vmatprep.subr.mxu0 %v56
    %137 = vmatpush1.msra.mxu0 %v55
    %138 = vmatprep.subr.mxu0 %v53
    %139 = vmatpush1.msra.mxu0 %v52
    %140 = vmatprep.subr.mxu0 %v50
    %141 = vmatpush1.msra.mxu0 %v49
    %142 = vmatprep.subr.mxu0 %v47
    %143 = vmatpush1.msra.mxu0 %v46
    %144 = vmatprep.subr.mxu0 %v44
    %145 = vmatpush1.msra.mxu0 %v43
    %146 = vmatprep.subr.mxu0 %v41
    %147 = vmatpush1.msra.mxu0 %v40
    %148 = vmatprep.subr.mxu0 %v38
    %149 = vmatpush1.msra.mxu0 %v37
    %150 = vmatprep.subr.mxu0 %v35
    %151 = vmatpush1.msra.mxu0 %v34
    %152 = vmatprep.subr.mxu0 %v32
    %153 = vmatpush1.msra.mxu0 %v31
    %154 = vmatprep.subr.mxu0 %v29
    %155 = vmatpush1.msra.mxu0 %v28
    %156 = vmatprep.subr.mxu0 0.0
    %157 = vmatpush2.msra.mxu0 0.0
    %158 = vmatprep.subr.mxu0 0.0
    %159 = vmatpush2.msra.mxu0 0.0
    %160 = vmatprep.subr.mxu0 0.0
    %161 = vmatpush2.msra.mxu0 0.0
    %162 = vmatprep.subr.mxu0 0.0
    %163 = vmatpush2.msra.mxu0 0.0
    %164 = vmatprep.subr.mxu0 0.0
    %165 = vmatpush2.msra.mxu0 0.0
    %166 = vmatprep.subr.mxu0 0.0
    %167 = vmatpush2.msra.mxu0 0.0
    %168 = vmatprep.subr.mxu0 0.0
    %169 = vmatpush2.msra.mxu0 0.0
    %170 = vmatprep.subr.mxu0 0.0
    %171 = vmatpush2.msra.mxu0 0.0
    %172 = vmatprep.subr.mxu0 %v98
    %173 = vmatpush2.msra.mxu0 %v97
    %174 = vmatprep.subr.mxu0 %v95
    %175 = vmatpush2.msra.mxu0 %v94
    %176 = vmatprep.subr.mxu0 %v92
    %177 = vmatpush2.msra.mxu0 %v91
    %178 = vmatprep.subr.mxu0 %v89
    %179 = vmatpush2.msra.mxu0 %v88
    %180 = vmatprep.subr.mxu0 %v86
    %181 = vmatpush2.msra.mxu0 %v85
    %182 = vmatprep.subr.mxu0 %v83
    %183 = vmatpush2.msra.mxu0 %v82
    %184 = vmatprep.subr.mxu0 %v80
    %185 = vmatpush2.msra.mxu0 %v79
    %186 = vmatprep.subr.mxu0 %v77
    %187 = vmatpush2.msra.mxu0 %v76
    %188 = vmatprep.mubr.f32.mxu0 %v122
    %189 = vmatmul.mubr.f32.gmra.mxu0 %v102
    %v190 = vpop.f32.mrf.mxu0
    %v191 = vadd.f32 %v107, %v190
    %v192 = vpop.f32.mrf.mxu0
    %v193 = vadd.f32 %v111, %v192
    %194 = vdwg.mxu0
    %195 = vmatprep.subr.mxu0 0.0
    %196 = vmatpush1.msra.mxu0 %v75
    %197 = vmatprep.subr.mxu0 0.0
    %198 = vmatpush1.msra.mxu0 %v72
    %199 = vmatprep.subr.mxu0 0.0
    %200 = vmatpush1.msra.mxu0 %v69
    %201 = vmatprep.subr.mxu0 0.0
    %202 = vmatpush1.msra.mxu0 %v66
    %203 = vmatprep.subr.mxu0 0.0
    %204 = vmatpush1.msra.mxu0 %v63
    %205 = vmatprep.subr.mxu0 0.0
    %206 = vmatpush1.msra.mxu0 %v60
    %207 = vmatprep.subr.mxu0 0.0
    %208 = vmatpush1.msra.mxu0 %v57
    %209 = vmatprep.subr.mxu0 0.0
    %210 = vmatpush1.msra.mxu0 %v54
    %211 = vmatprep.subr.mxu0 0.0
    %212 = vmatpush1.msra.mxu0 %v51
    %213 = vmatprep.subr.mxu0 0.0
    %214 = vmatpush1.msra.mxu0 %v48
    %215 = vmatprep.subr.mxu0 0.0
    %216 = vmatpush1.msra.mxu0 %v45
    %217 = vmatprep.subr.mxu0 0.0
    %218 = vmatpush1.msra.mxu0 %v42
    %219 = vmatprep.subr.mxu0 0.0
    %220 = vmatpush1.msra.mxu0 %v39
    %221 = vmatprep.subr.mxu0 0.0
    %222 = vmatpush1.msra.mxu0 %v36
    %223 = vmatprep.subr.mxu0 0.0
    %224 = vmatpush1.msra.mxu0 %v33
    %225 = vmatprep.subr.mxu0 0.0
    %226 = vmatpush1.msra.mxu0 %v30
    %227 = vmatprep.subr.mxu0 0.0
    %228 = vmatpush2.msra.mxu0 0.0
    %229 = vmatprep.subr.mxu0 0.0
    %230 = vmatpush2.msra.mxu0 0.0
    %231 = vmatprep.subr.mxu0 0.0
    %232 = vmatpush2.msra.mxu0 0.0
    %233 = vmatprep.subr.mxu0 0.0
    %234 = vmatpush2.msra.mxu0 0.0
    %235 = vmatprep.subr.mxu0 0.0
    %236 = vmatpush2.msra.mxu0 0.0
    %237 = vmatprep.subr.mxu0 0.0
    %238 = vmatpush2.msra.mxu0 0.0
    %239 = vmatprep.subr.mxu0 0.0
    %240 = vmatpush2.msra.mxu0 0.0
    %241 = vmatprep.subr.mxu0 0.0
    %242 = vmatpush2.msra.mxu0 0.0
    %243 = vmatprep.subr.mxu0 0.0
    %244 = vmatpush2.msra.mxu0 %v99
    %245 = vmatprep.subr.mxu0 0.0
    %246 = vmatpush2.msra.mxu0 %v96
    %247 = vmatprep.subr.mxu0 0.0
    %248 = vmatpush2.msra.mxu0 %v93
    %249 = vmatprep.subr.mxu0 0.0
    %250 = vmatpush2.msra.mxu0 %v90
    %251 = vmatprep.subr.mxu0 0.0
    %252 = vmatpush2.msra.mxu0 %v87
    %253 = vmatprep.subr.mxu0 0.0
    %254 = vmatpush2.msra.mxu0 %v84
    %255 = vmatprep.subr.mxu0 0.0
    %256 = vmatpush2.msra.mxu0 %v81
    %257 = vmatprep.subr.mxu0 0.0
    %258 = vmatpush2.msra.mxu0 %v78
    %259 = vmatprep.mubr.f32.mxu0 %v122
    %260 = vmatmul.mubr.f32.gmra.mxu0 %v102
    %v261 = vpop.f32.mrf.mxu0
    %v262 = vadd.f32 %v115, %v261
    %v263 = vpop.f32.mrf.mxu0
    %264 = vdwg.mxu0
    %v265 = vmax.f32 %v191, 0.0
    %v266 = vmax.f32 %v193, 0.0
    %v267 = vmax.f32 %v262, 0.0
    %v268 = vld [vmem:[%s2] sm:$0xff]
    %270 = vset.pattern.permute.xlu0 0
    %271 = vperm.xlu0 %270, %v268
    %v272 = vpop.permute.xlu0 %271
    %v274 = vlaneseq
    %v275 = vshrl.u32 %v274, 7
    %v276 = vsub.s32 0, %v275
    %v277 = vrot.slane %v265, %v276
    %v278 = vlaneseq
    %v279 = vshrl.u32 %v278, 7
    %v280 = vsub.s32 0, %v279
    %v281 = vrot.slane %v266, %v280
    %v282 = vlaneseq
    %v283 = vshrl.u32 %v282, 7
    %v284 = vsub.s32 0, %v283
    %v285 = vrot.slane %v267, %v284
    %v286 = vmul.f32 %v272, %v277
    %v287 = vmul.f32 %v272, %v281
    %v288 = vmul.f32 %v272, %v285
    %289 = vset.pattern.permute.xlu0 3
    %290 = vperm.xlu0 %289, %v268
    %v291 = vpop.permute.xlu0 %290
    %v293 = vadd.f32 %v291, %v286
    %v294 = vadd.f32 %v291, %v287
    %v295 = vadd.f32 %v291, %v288
    %296 = vset.pattern.permute.xlu0 1
    %297 = vperm.xlu0 %296, %v268
    %v298 = vpop.permute.xlu0 %297
    %v300 = vlaneseq
    %v301 = vshrl.u32 %v300, 7
    %v302 = vsub.s32 1, %v301
    %v303 = vrot.slane %v265, %v302
    %v304 = vlaneseq
    %v305 = vshrl.u32 %v304, 7
    %v306 = vsub.s32 1, %v305
    %v307 = vrot.slane %v266, %v306
    %v308 = vlaneseq
    %v309 = vshrl.u32 %v308, 7
    %v310 = vsub.s32 1, %v309
    %v311 = vrot.slane %v267, %v310
    %v312 = vmul.f32 %v298, %v303
    %v313 = vmul.f32 %v298, %v307
    %v314 = vmul.f32 %v298, %v311
    %v315 = vadd.f32 %v293, %v312
    %v316 = vadd.f32 %v294, %v313
    %v317 = vadd.f32 %v295, %v314
    %318 = vset.pattern.permute.xlu0 2
    %319 = vperm.xlu0 %318, %v268
    %v320 = vpop.permute.xlu0 %319
    %v322 = vlaneseq
    %v323 = vshrl.u32 %v322, 7
    %v324 = vsub.s32 2, %v323
    %v325 = vrot.slane %v265, %v324
    %v326 = vlaneseq
    %v327 = vshrl.u32 %v326, 7
    %v328 = vsub.s32 2, %v327
    %v329 = vrot.slane %v266, %v328
    %v330 = vlaneseq
    %v331 = vshrl.u32 %v330, 7
    %v332 = vsub.s32 2, %v331
    %v333 = vrot.slane %v267, %v332
    %v334 = vmul.f32 %v320, %v325
    %v335 = vmul.f32 %v320, %v329
    %v336 = vmul.f32 %v320, %v333
    %v337 = vadd.f32 %v315, %v334
    %v338 = vadd.f32 %v316, %v335
    %v339 = vadd.f32 %v317, %v336
    %v340 = vmax.f32 %v337, 1.1654336
    %v341 = vmax.f32 %v338, 1.1654336
    %v342 = vmax.f32 %v339, 1.1654336
    %v343 = vmin.f32 %v340, 9.495014
    %v344 = vmin.f32 %v341, 9.495014
    %v345 = vmin.f32 %v342, 9.495014
    %346 = vst [vmem:[%s3] sm:$0xff] %v343
    %347 = vst [vmem:[%s3 + $0x8] sm:$0xff] %v344
    %vm348 = vcmask 850944
    %349 = vst.msk [vmem:[%s3 + $0x10] sm:$0xff] %vm348, %v345
    // Predicated region
    $region18: #{model_forward.1} parent=1 // pred_check
      _
    $region19: #{model_forward.1} parent=1 // pred_check_branch
      %351 = sbr.rel (0) target = $region21
    $region20: #{model_forward.1} parent=1 // pred_region
      _
    $region21: #{model_forward.1} parent=1 // pred_fallthru
      _
    // Predicated region
    $region22: #{model_forward.1} parent=1 // pred_check
      _
    $region23: #{model_forward.1} parent=1 // pred_check_branch
      %353 = sbr.rel (0) target = $region25
    $region24: #{model_forward.1} parent=1 // pred_region
      _
    $region25: #{model_forward.1} parent=1 // pred_fallthru
      _
    %354 = vsyncpa [#allocation3], 1

</llo_original>
